<compile_context>
chip_gen: v7x
topology: tpu7x:2x2x1
jax: 0.10.0
libtpu: 0.0.40
codegen_flags: <defaults>
</compile_context>

<pallas_src>
import functools

import jax
import jax.numpy as jnp
from jax import lax
from jax.experimental import pallas as pl
from jax.experimental.pallas import tpu as pltpu


def _round_up(x, m):
    return ((x + m - 1) // m) * m


# ---------------------------------------------------------------------------
# Stage 1: per-sample rank of the ground-truth class (ascending order).
# ---------------------------------------------------------------------------
def rank_kernel(gt_ref, tl_ref, rank_ref, *, c_actual, mask_classes):
    tr, c_pad = tl_ref.shape
    gt = gt_ref[...]                                     # (TR, 1) int32
    tl = tl_ref[...].astype(jnp.float32)                 # (TR, C_pad) f32

    class_ids = lax.broadcasted_iota(jnp.int32, (tr, c_pad), 1)
    is_gt = class_ids == gt                              # (TR, C_pad)
    neg_big = jnp.finfo(jnp.float32).min
    gt_val = jnp.max(jnp.where(is_gt, tl, neg_big), axis=1, keepdims=True)

    # NOTE: for very large C this lane reduction could be offloaded to the MXU
    # (dot with a ones vector); not worth it at classification-sized C.
    below = tl < gt_val
    if mask_classes:                                     # static: only if padded
        below = jnp.logical_and(below, class_ids < c_actual)
    rank_ref[...] = jnp.sum(below.astype(jnp.float32), axis=1, keepdims=True)


# ---------------------------------------------------------------------------
# Stage 2: tiled pairwise margin-ranking hinge, accumulated over j.
# ---------------------------------------------------------------------------
def pairwise_kernel(rank_col_ref, rank_row_ref, d_col_ref, d_row_ref,
                    out_ref, total_acc, cnt_acc, *, margin, n_actual,
                    mask_rows):
    ti = rank_col_ref.shape[0]
    tj = rank_row_ref.shape[1]
    i = pl.program_id(0)
    j = pl.program_id(1)

    @pl.when(j == 0)
    def _():
        total_acc[...] = jnp.zeros_like(total_acc)
        cnt_acc[...] = jnp.zeros_like(cnt_acc)

    r_i = rank_col_ref[...]                              # (TI, 1)
    r_j = rank_row_ref[...]                              # (1, TJ)
    d_i = d_col_ref[...]                                 # (TI, 1)
    d_j = d_row_ref[...]                                 # (1, TJ)

    y = r_i - r_j                                        # (TI, TJ)
    diff = d_i - d_j                                     # (TI, TJ)
    tgt = y > 0.0
    if mask_rows:                                        # static: only if padded
        gi = i * ti + lax.broadcasted_iota(jnp.int32, (ti, 1), 0)
        gj = j * tj + lax.broadcasted_iota(jnp.int32, (1, tj), 1)
        valid = jnp.logical_and(gi < n_actual, gj < n_actual)
        tgt = jnp.logical_and(tgt, valid)
    tgt = tgt.astype(jnp.float32)
    contrib = jnp.maximum(margin - y * diff, 0.0) * tgt  # fused hinge + mask

    total_acc[...] += jnp.sum(contrib, axis=1, keepdims=True)  # lane reduce
    cnt_acc[...] += jnp.sum(tgt, axis=1, keepdims=True)

    @pl.when(j == pl.num_programs(1) - 1)
    def _():
        tot = jnp.sum(total_acc[...])
        cnt = jnp.sum(cnt_acc[...])
        lane = lax.broadcasted_iota(jnp.int32, out_ref.shape, 1)
        out_ref[...] = jnp.where(lane == 0, tot,
                                 jnp.where(lane == 1, cnt, 0.0))


# ---------------------------------------------------------------------------
# Wrapper
# ---------------------------------------------------------------------------
def r2kd(gt, t_logits, s_logits, dis, *, margin=0.1,
         temperature=4.0, sigma=1.0):
    # s_logits / temperature / sigma are accepted for interface parity but are
    # unused by the reference forward pass.
    del s_logits, temperature, sigma
    n, c = t_logits.shape

    # ---- tiling: lane-dense N padding; pairwise tile <= 256x512 -------------
    n_pad = _round_up(n, 128)
    if n_pad <= 512:
        ti = tj = tr = n_pad
    else:
        n_pad = _round_up(n, 512)
        ti, tj, tr = 256, 512, 256
    c_pad = _round_up(c, 128)            # lane-dense class axis

    grid_i = n_pad // ti
    grid_j = n_pad // tj
    grid_r = n_pad // tr

    mask_rows = n_pad != n               # static: emit padding mask only if needed
    mask_classes = c_pad != c

    # ---- input shaping (t_logits keeps its native dtype on the DMA path) ----
    gt2 = jnp.pad(gt.astype(jnp.int32).reshape(n, 1), ((0, n_pad - n), (0, 0)))
    tl = jnp.pad(t_logits, ((0, n_pad - n), (0, c_pad - c)))
    d_col = jnp.pad((-dis).astype(jnp.float32).reshape(n, 1),
                    ((0, n_pad - n), (0, 0)))
    d_row = d_col.reshape(1, n_pad)      # free row-major reshape

    # ---- stage 1: per-row gt rank -------------------------------------------
    rank_col = pl.pallas_call(
        functools.partial(rank_kernel, c_actual=c, mask_classes=mask_classes),
        out_shape=jax.ShapeDtypeStruct((n_pad, 1), jnp.float32),
        grid_spec=pltpu.PrefetchScalarGridSpec(
            num_scalar_prefetch=0,
            grid=(grid_r,),
            in_specs=[pl.BlockSpec((tr, 1), lambda i: (i, 0)),
                      pl.BlockSpec((tr, c_pad), lambda i: (i, 0))],
            out_specs=pl.BlockSpec((tr, 1), lambda i: (i, 0))),
        compiler_params=pltpu.CompilerParams(
            dimension_semantics=("parallel",)),
    )(gt2, tl)
    rank_row = rank_col.reshape(1, n_pad)   # free reshape, no in-kernel transpose

    # ---- stage 2: tiled pairwise hinge loss ---------------------------------
    partials = pl.pallas_call(
        functools.partial(pairwise_kernel, margin=float(margin), n_actual=n,
                          mask_rows=mask_rows),
        out_shape=jax.ShapeDtypeStruct((grid_i * 8, 128), jnp.float32),
        grid_spec=pltpu.PrefetchScalarGridSpec(
            num_scalar_prefetch=0,
            grid=(grid_i, grid_j),
            in_specs=[pl.BlockSpec((ti, 1), lambda i, j: (i, 0)),
                      pl.BlockSpec((1, tj), lambda i, j: (0, j)),
                      pl.BlockSpec((ti, 1), lambda i, j: (i, 0)),
                      pl.BlockSpec((1, tj), lambda i, j: (0, j))],
            out_specs=pl.BlockSpec((8, 128), lambda i, j: (i, 0)),
            scratch_shapes=[pltpu.VMEM((ti, 1), jnp.float32),
                            pltpu.VMEM((ti, 1), jnp.float32)]),
        compiler_params=pltpu.CompilerParams(
            dimension_semantics=("parallel", "arbitrary")),
    )(rank_col, rank_row, d_col, d_row)

    # ---- final scalar mean (tiny XLA op) ------------------------------------
    p = partials.reshape(grid_i, 8, 128)
    total = jnp.sum(p[:, 0, 0])
    cnt = jnp.sum(p[:, 0, 1])
    return jnp.where(cnt > 0.0, total / jnp.maximum(cnt, 1.0), 0.0)


# ---------------------------------------------------------------------------
# Pure-JAX mirror of the PyTorch forward (for correctness checking only).
# ---------------------------------------------------------------------------
def r2kd_ref(gt, t_logits, dis, margin):
    d = -dis
    order = jnp.argsort(t_logits, axis=1)
    gt_rank = jnp.argmax((order == gt[:, None]).astype(jnp.float32),
                         axis=1).astype(jnp.float32)
    x1 = d[:, None]
    x2 = d[None, :]
    y = gt_rank[:, None] - gt_rank[None, :]
    tgt = y > 0
    per = jnp.maximum(margin - y * (x1 - x2), 0.0)
    cnt = jnp.sum(tgt)
    return jnp.where(cnt > 0,
                     jnp.sum(jnp.where(tgt, per, 0.0)) / jnp.maximum(cnt, 1),
                     0.0)


if __name__ == "__main__":
    key = jax.random.PRNGKey(0)
    margin = 0.1

    # case 1: batch 8, 16 classes (row + class lane padding exercised)
    # case 2: batch 13, 20 classes
    for (n, c) in ((8, 16), (13, 20)):
        k1, k2, k3, k4, key = jax.random.split(key, 5)
        gt = jax.random.randint(k1, (n,), 0, c, dtype=jnp.int32)
        t_logits = jax.random.normal(k2, (n, c), dtype=jnp.float32)
        s_logits = jax.random.normal(k3, (n, c), dtype=jnp.float32)  # unused
        dis = jax.random.uniform(k4, (n,), dtype=jnp.float32)

        loss = r2kd(gt, t_logits, s_logits, dis, margin=margin)
        jax.block_until_ready(loss)
        ref = r2kd_ref(gt, t_logits, dis, margin)
        assert jnp.allclose(loss, ref, atol=1e-5, rtol=1e-5), (
            (n, c), float(loss), float(ref))

    # degenerate case: identical rows + identical labels -> no positive pair
    n, c = 8, 16
    row = jnp.linspace(-1.0, 1.0, c, dtype=jnp.float32)
    t_logits = jnp.tile(row[None, :], (n, 1))
    gt = jnp.full((n,), 3, dtype=jnp.int32)
    s_logits = jnp.zeros((n, c), jnp.float32)
    dis = jnp.linspace(0.0, 1.0, n, dtype=jnp.float32)
    loss0 = r2kd(gt, t_logits, s_logits, dis, margin=margin)
    jax.block_until_ready(loss0)
    assert jnp.allclose(loss0, 0.0, atol=1e-6), float(loss0)

    print("KERNEL_OK")
</pallas_src>

<mosaic_0001>
module attributes {stable_mosaic.version = 11 : i64} {
  func.func @rank_kernel(%arg0: i32, %arg1: memref<128x1xi32, #tpu.memory_space<vmem>>, %arg2: memref<128x128xf32, #tpu.memory_space<vmem>>, %arg3: memref<128x1xf32, #tpu.memory_space<vmem>>) attributes {dimension_semantics = [#tpu.dimension_semantics<parallel>], iteration_bounds = array<i64: 1>, scalar_prefetch = 0 : i64, scratch_operands = 0 : i64, tpu.core_type = #tpu.core_type<tc>, window_params = [{transform_indices = @transform_0, window_bounds = array<i64: 128, 1>}, {transform_indices = @transform_1, window_bounds = array<i64: 128, 128>}, {transform_indices = @transform_2, window_bounds = array<i64: 128, 1>}]} {
    %c0 = arith.constant 0 : index
    %c0_0 = arith.constant 0 : index
    %0 = vector.load %arg1[%c0, %c0_0] : memref<128x1xi32, #tpu.memory_space<vmem>>, vector<128x1xi32>
    %c0_1 = arith.constant 0 : index
    %c0_2 = arith.constant 0 : index
    %1 = vector.load %arg2[%c0_1, %c0_2] : memref<128x128xf32, #tpu.memory_space<vmem>>, vector<128x128xf32>
    %2 = tpu.iota {dimensions = array<i32: 1>} : vector<128x128xi32>
    %3 = vector.broadcast %0 : vector<128x1xi32> to vector<128x128xi32>
    %4 = arith.cmpi eq, %2, %3 : vector<128x128xi32>
    %cst = arith.constant -3.40282347E+38 : f32
    %5 = vector.broadcast %cst : f32 to vector<128x128xf32>
    %6 = arith.select %4, %1, %5 : vector<128x128xi1>, vector<128x128xf32>
    %cst_3 = arith.constant dense<0xFF800000> : vector<128xf32>
    %7 = vector.multi_reduction <maximumf>, %6, %cst_3 [1] : vector<128x128xf32> to vector<128xf32>
    %8 = vector.shape_cast %7 : vector<128xf32> to vector<128x1xf32>
    %9 = vector.broadcast %8 : vector<128x1xf32> to vector<128x128xf32>
    %10 = arith.cmpf olt, %1, %9 : vector<128x128xf32>
    %c16_i32 = arith.constant 16 : i32
    %11 = vector.broadcast %c16_i32 : i32 to vector<128x128xi32>
    %12 = arith.cmpi slt, %2, %11 : vector<128x128xi32>
    %13 = arith.andi %10, %12 : vector<128x128xi1>
    %14 = arith.extui %13 : vector<128x128xi1> to vector<128x128xi32>
    %15 = arith.sitofp %14 : vector<128x128xi32> to vector<128x128xf32>
    %cst_4 = arith.constant dense<0.000000e+00> : vector<128xf32>
    %16 = vector.multi_reduction <add>, %15, %cst_4 [1] : vector<128x128xf32> to vector<128xf32>
    %17 = vector.shape_cast %16 : vector<128xf32> to vector<128x1xf32>
    %c0_5 = arith.constant 0 : index
    %c0_6 = arith.constant 0 : index
    %18 = vector.load %arg3[%c0_5, %c0_6] : memref<128x1xf32, #tpu.memory_space<vmem>>, vector<128x1xf32>
    tpu.vector_store %arg3[%c0_5, %c0_6], %17 {strides = array<i32>} : memref<128x1xf32, #tpu.memory_space<vmem>>, vector<128x1xf32>,
    return
  }
  func.func @transform_0(%arg0: i32) -> (i32, i32) {
    %c0_i32 = arith.constant 0 : i32
    %c0_i32_0 = arith.constant 0 : i32
    return %arg0, %c0_i32 : i32, i32
  }
  func.func @transform_1(%arg0: i32) -> (i32, i32) {
    %c0_i32 = arith.constant 0 : i32
    %c0_i32_0 = arith.constant 0 : i32
    return %arg0, %c0_i32 : i32, i32
  }
  func.func @transform_2(%arg0: i32) -> (i32, i32) {
    %c0_i32 = arith.constant 0 : i32
    %c0_i32_0 = arith.constant 0 : i32
    return %arg0, %c0_i32 : i32, i32
  }
}

</mosaic_0001>

<llo_original>
// kernel: tpu_custom_call.1
$region0: #{tpu_custom_call.1}
  #allocation0 [shape = 'u32[]', space=smem, size = 0x4, offset = 0x4, fixed_abs, tag = 'smem constant byte address 0x4 - core index']
  #allocation1 [shape = 'u32[144,128]{1,0:T(1,128)}', space=vmem, size = 0x12000, scoped, tag = 'internal scratch']
  %s0 = inlined_call_operand.vmem [shape: s32[128,1], index: 0, kind: input, shape index: {}]
  %s1 = inlined_call_operand.vmem [shape: f32[128,128], index: 1, kind: input, shape index: {}]
  %s2 = inlined_call_operand.vmem [shape: f32[128,1], index: 2, kind: output, shape index: {}]
  %s3 = sld [smem:[#allocation0]]
  $region18: #{tpu_custom_call.1} parent=0
    _
  %s5 = ssub.s32 1, %s3
  %s6 = scalar_select 0, %s5, %s3
  // Predicated region
  $region2: #{tpu_custom_call.1} parent=0 // pred_check
    _
  $region3: #{tpu_custom_call.1} parent=0 // pred_check_branch
    %8 = sbr.rel (0) target = $region5
  $region4: #{tpu_custom_call.1} parent=0 // pred_region
    _
  $region5: #{tpu_custom_call.1} parent=0 // pred_fallthru
    _
  // Predicated region
  $region6: #{tpu_custom_call.1} parent=0 // pred_check
    _
  $region7: #{tpu_custom_call.1} parent=0 // pred_check_branch
    %10 = sbr.rel (0) target = $region9
  $region8: #{tpu_custom_call.1} parent=0 // pred_region
    _
  $region9: #{tpu_custom_call.1} parent=0 // pred_fallthru
    _
  %v11 = vld [vmem:[%s0] sm:$0xff]
  %v12 = vld [vmem:[%s0 + $0x8] sm:$0xff]
  %v13 = vld [vmem:[%s0 + $0x10] sm:$0xff]
  %v14 = vld [vmem:[%s0 + $0x18] sm:$0xff]
  %v15 = vld [vmem:[%s0 + $0x20] sm:$0xff]
  %v16 = vld [vmem:[%s0 + $0x28] sm:$0xff]
  %v17 = vld [vmem:[%s0 + $0x30] sm:$0xff]
  %v18 = vld [vmem:[%s0 + $0x38] sm:$0xff]
  %v19 = vld [vmem:[%s0 + $0x40] sm:$0xff]
  %v20 = vld [vmem:[%s0 + $0x48] sm:$0xff]
  %v21 = vld [vmem:[%s0 + $0x50] sm:$0xff]
  %v22 = vld [vmem:[%s0 + $0x58] sm:$0xff]
  %v23 = vld [vmem:[%s0 + $0x60] sm:$0xff]
  %v24 = vld [vmem:[%s0 + $0x68] sm:$0xff]
  %v25 = vld [vmem:[%s0 + $0x70] sm:$0xff]
  %v26 = vld [vmem:[%s0 + $0x78] sm:$0xff]
  %v27 = vld [vmem:[%s1] sm:$0xff]
  %v28 = vld [vmem:[%s1 + $0x8] sm:$0xff]
  %v29 = vld [vmem:[%s1 + $0x10] sm:$0xff]
  %v30 = vld [vmem:[%s1 + $0x18] sm:$0xff]
  %v31 = vld [vmem:[%s1 + $0x20] sm:$0xff]
  %v32 = vld [vmem:[%s1 + $0x28] sm:$0xff]
  %v33 = vld [vmem:[%s1 + $0x30] sm:$0xff]
  %v34 = vld [vmem:[%s1 + $0x38] sm:$0xff]
  %v35 = vld [vmem:[%s1 + $0x40] sm:$0xff]
  %v36 = vld [vmem:[%s1 + $0x48] sm:$0xff]
  %v37 = vld [vmem:[%s1 + $0x50] sm:$0xff]
  %v38 = vld [vmem:[%s1 + $0x58] sm:$0xff]
  %v39 = vld [vmem:[%s1 + $0x60] sm:$0xff]
  %v40 = vld [vmem:[%s1 + $0x68] sm:$0xff]
  %v41 = vld [vmem:[%s1 + $0x70] sm:$0xff]
  %v42 = vld [vmem:[%s1 + $0x78] sm:$0xff]
  %v43 = vlaneseq
  %v44 = vand.u32 %v43, 127
  %45 = vset.pattern.permute.xlu0 0
  %46 = vperm.xlu0 %45, %v11
  %v47 = vpop.permute.xlu0 %46
  %48 = vset.pattern.permute.xlu0 0
  %49 = vperm.xlu0 %48, %v12
  %v50 = vpop.permute.xlu0 %49
  %51 = vset.pattern.permute.xlu0 0
  %52 = vperm.xlu0 %51, %v13
  %v53 = vpop.permute.xlu0 %52
  %54 = vset.pattern.permute.xlu0 0
  %55 = vperm.xlu0 %54, %v14
  %v56 = vpop.permute.xlu0 %55
  %57 = vset.pattern.permute.xlu0 0
  %58 = vperm.xlu0 %57, %v15
  %v59 = vpop.permute.xlu0 %58
  %60 = vset.pattern.permute.xlu0 0
  %61 = vperm.xlu0 %60, %v16
  %v62 = vpop.permute.xlu0 %61
  %63 = vset.pattern.permute.xlu0 0
  %64 = vperm.xlu0 %63, %v17
  %v65 = vpop.permute.xlu0 %64
  %66 = vset.pattern.permute.xlu0 0
  %67 = vperm.xlu0 %66, %v18
  %v68 = vpop.permute.xlu0 %67
  %69 = vset.pattern.permute.xlu0 0
  %70 = vperm.xlu0 %69, %v19
  %v71 = vpop.permute.xlu0 %70
  %72 = vset.pattern.permute.xlu0 0
  %73 = vperm.xlu0 %72, %v20
  %v74 = vpop.permute.xlu0 %73
  %75 = vset.pattern.permute.xlu0 0
  %76 = vperm.xlu0 %75, %v21
  %v77 = vpop.permute.xlu0 %76
  %78 = vset.pattern.permute.xlu0 0
  %79 = vperm.xlu0 %78, %v22
  %v80 = vpop.permute.xlu0 %79
  %81 = vset.pattern.permute.xlu0 0
  %82 = vperm.xlu0 %81, %v23
  %v83 = vpop.permute.xlu0 %82
  %84 = vset.pattern.permute.xlu0 0
  %85 = vperm.xlu0 %84, %v24
  %v86 = vpop.permute.xlu0 %85
  %87 = vset.pattern.permute.xlu0 0
  %88 = vperm.xlu0 %87, %v25
  %v89 = vpop.permute.xlu0 %88
  %90 = vset.pattern.permute.xlu0 0
  %91 = vperm.xlu0 %90, %v26
  %v92 = vpop.permute.xlu0 %91
  %vm93 = vcmp.eq.s32.totalorder %v44, %v47
  %vm94 = vcmp.eq.s32.totalorder %v44, %v50
  %vm95 = vcmp.eq.s32.totalorder %v44, %v53
  %vm96 = vcmp.eq.s32.totalorder %v44, %v56
  %vm97 = vcmp.eq.s32.totalorder %v44, %v59
  %vm98 = vcmp.eq.s32.totalorder %v44, %v62
  %vm99 = vcmp.eq.s32.totalorder %v44, %v65
  %vm100 = vcmp.eq.s32.totalorder %v44, %v68
  %vm101 = vcmp.eq.s32.totalorder %v44, %v71
  %vm102 = vcmp.eq.s32.totalorder %v44, %v74
  %vm103 = vcmp.eq.s32.totalorder %v44, %v77
  %vm104 = vcmp.eq.s32.totalorder %v44, %v80
  %vm105 = vcmp.eq.s32.totalorder %v44, %v83
  %vm106 = vcmp.eq.s32.totalorder %v44, %v86
  %vm107 = vcmp.eq.s32.totalorder %v44, %v89
  %vm108 = vcmp.eq.s32.totalorder %v44, %v92
  %v109 = vsel %vm93, %v27, -3.4028235e+38
  %v110 = vsel %vm94, %v28, -3.4028235e+38
  %v111 = vsel %vm95, %v29, -3.4028235e+38
  %v112 = vsel %vm96, %v30, -3.4028235e+38
  %v113 = vsel %vm97, %v31, -3.4028235e+38
  %v114 = vsel %vm98, %v32, -3.4028235e+38
  %v115 = vsel %vm99, %v33, -3.4028235e+38
  %v116 = vsel %vm100, %v34, -3.4028235e+38
  %v117 = vsel %vm101, %v35, -3.4028235e+38
  %v118 = vsel %vm102, %v36, -3.4028235e+38
  %v119 = vsel %vm103, %v37, -3.4028235e+38
  %v120 = vsel %vm104, %v38, -3.4028235e+38
  %v121 = vsel %vm105, %v39, -3.4028235e+38
  %v122 = vsel %vm106, %v40, -3.4028235e+38
  %v123 = vsel %vm107, %v41, -3.4028235e+38
  %v124 = vsel %vm108, %v42, -3.4028235e+38
  %125 = vmax.xlane.f32.xlu0 %v109
  %v126 = vpop.xlane.xlu0 %125
  %127 = vmax.xlane.f32.xlu0 %v110
  %v128 = vpop.xlane.xlu0 %127
  %129 = vmax.xlane.f32.xlu0 %v111
  %v130 = vpop.xlane.xlu0 %129
  %131 = vmax.xlane.f32.xlu0 %v112
  %v132 = vpop.xlane.xlu0 %131
  %133 = vmax.xlane.f32.xlu0 %v113
  %v134 = vpop.xlane.xlu0 %133
  %135 = vmax.xlane.f32.xlu0 %v114
  %v136 = vpop.xlane.xlu0 %135
  %137 = vmax.xlane.f32.xlu0 %v115
  %v138 = vpop.xlane.xlu0 %137
  %139 = vmax.xlane.f32.xlu0 %v116
  %v140 = vpop.xlane.xlu0 %139
  %141 = vmax.xlane.f32.xlu0 %v117
  %v142 = vpop.xlane.xlu0 %141
  %143 = vmax.xlane.f32.xlu0 %v118
  %v144 = vpop.xlane.xlu0 %143
  %145 = vmax.xlane.f32.xlu0 %v119
  %v146 = vpop.xlane.xlu0 %145
  %147 = vmax.xlane.f32.xlu0 %v120
  %v148 = vpop.xlane.xlu0 %147
  %149 = vmax.xlane.f32.xlu0 %v121
  %v150 = vpop.xlane.xlu0 %149
  %151 = vmax.xlane.f32.xlu0 %v122
  %v152 = vpop.xlane.xlu0 %151
  %153 = vmax.xlane.f32.xlu0 %v123
  %v154 = vpop.xlane.xlu0 %153
  %155 = vmax.xlane.f32.xlu0 %v124
  %v156 = vpop.xlane.xlu0 %155
  %vm157 = vcmp.lt.f32.partialorder %v27, %v126
  %vm158 = vcmp.lt.f32.partialorder %v28, %v128
  %vm159 = vcmp.lt.f32.partialorder %v29, %v130
  %vm160 = vcmp.lt.f32.partialorder %v30, %v132
  %vm161 = vcmp.lt.f32.partialorder %v31, %v134
  %vm162 = vcmp.lt.f32.partialorder %v32, %v136
  %vm163 = vcmp.lt.f32.partialorder %v33, %v138
  %vm164 = vcmp.lt.f32.partialorder %v34, %v140
  %vm165 = vcmp.lt.f32.partialorder %v35, %v142
  %vm166 = vcmp.lt.f32.partialorder %v36, %v144
  %vm167 = vcmp.lt.f32.partialorder %v37, %v146
  %vm168 = vcmp.lt.f32.partialorder %v38, %v148
  %vm169 = vcmp.lt.f32.partialorder %v39, %v150
  %vm170 = vcmp.lt.f32.partialorder %v40, %v152
  %vm171 = vcmp.lt.f32.partialorder %v41, %v154
  %vm172 = vcmp.lt.f32.partialorder %v42, %v156
  %vm173 = vcmp.lt.s32.totalorder %v44, 16
  %vm174 = vmand %vm157, %vm173
  %vm175 = vmand %vm158, %vm173
  %vm176 = vmand %vm159, %vm173
  %vm177 = vmand %vm160, %vm173
  %vm178 = vmand %vm161, %vm173
  %vm179 = vmand %vm162, %vm173
  %vm180 = vmand %vm163, %vm173
  %vm181 = vmand %vm164, %vm173
  %vm182 = vmand %vm165, %vm173
  %vm183 = vmand %vm166, %vm173
  %vm184 = vmand %vm167, %vm173
  %vm185 = vmand %vm168, %vm173
  %vm186 = vmand %vm169, %vm173
  %vm187 = vmand %vm170, %vm173
  %vm188 = vmand %vm171, %vm173
  %vm189 = vmand %vm172, %vm173
  %v190 = vsel %vm174, 1, 0
  %v191 = vsel %vm175, 1, 0
  %v192 = vsel %vm176, 1, 0
  %v193 = vsel %vm177, 1, 0
  %v194 = vsel %vm178, 1, 0
  %v195 = vsel %vm179, 1, 0
  %v196 = vsel %vm180, 1, 0
  %v197 = vsel %vm181, 1, 0
  %v198 = vsel %vm182, 1, 0
  %v199 = vsel %vm183, 1, 0
  %v200 = vsel %vm184, 1, 0
  %v201 = vsel %vm185, 1, 0
  %v202 = vsel %vm186, 1, 0
  %v203 = vsel %vm187, 1, 0
  %v204 = vsel %vm188, 1, 0
  %v205 = vsel %vm189, 1, 0
  %v206 = vcvt.s32.f32 %v190
  %v207 = vcvt.s32.f32 %v191
  %v208 = vcvt.s32.f32 %v192
  %v209 = vcvt.s32.f32 %v193
  %v210 = vcvt.s32.f32 %v194
  %v211 = vcvt.s32.f32 %v195
  %v212 = vcvt.s32.f32 %v196
  %v213 = vcvt.s32.f32 %v197
  %v214 = vcvt.s32.f32 %v198
  %v215 = vcvt.s32.f32 %v199
  %v216 = vcvt.s32.f32 %v200
  %v217 = vcvt.s32.f32 %v201
  %v218 = vcvt.s32.f32 %v202
  %v219 = vcvt.s32.f32 %v203
  %v220 = vcvt.s32.f32 %v204
  %v221 = vcvt.s32.f32 %v205
  %222 = vadd.xlane.f32.xlu0 %v206
  %v223 = vpop.xlane.xlu0 %222
  %224 = vadd.xlane.f32.xlu0 %v207
  %v225 = vpop.xlane.xlu0 %224
  %226 = vadd.xlane.f32.xlu0 %v208
  %v227 = vpop.xlane.xlu0 %226
  %228 = vadd.xlane.f32.xlu0 %v209
  %v229 = vpop.xlane.xlu0 %228
  %230 = vadd.xlane.f32.xlu0 %v210
  %v231 = vpop.xlane.xlu0 %230
  %232 = vadd.xlane.f32.xlu0 %v211
  %v233 = vpop.xlane.xlu0 %232
  %234 = vadd.xlane.f32.xlu0 %v212
  %v235 = vpop.xlane.xlu0 %234
  %236 = vadd.xlane.f32.xlu0 %v213
  %v237 = vpop.xlane.xlu0 %236
  %238 = vadd.xlane.f32.xlu0 %v214
  %v239 = vpop.xlane.xlu0 %238
  %240 = vadd.xlane.f32.xlu0 %v215
  %v241 = vpop.xlane.xlu0 %240
  %242 = vadd.xlane.f32.xlu0 %v216
  %v243 = vpop.xlane.xlu0 %242
  %244 = vadd.xlane.f32.xlu0 %v217
  %v245 = vpop.xlane.xlu0 %244
  %246 = vadd.xlane.f32.xlu0 %v218
  %v247 = vpop.xlane.xlu0 %246
  %248 = vadd.xlane.f32.xlu0 %v219
  %v249 = vpop.xlane.xlu0 %248
  %250 = vadd.xlane.f32.xlu0 %v220
  %v251 = vpop.xlane.xlu0 %250
  %252 = vadd.xlane.f32.xlu0 %v221
  %v253 = vpop.xlane.xlu0 %252
  %vm254 = vcmask 7168
  %255 = vst.msk [vmem:[%s2] sm:$0xff] %vm254, %v223
  %256 = vst.msk [vmem:[%s2 + $0x8] sm:$0xff] %vm254, %v225
  %257 = vst.msk [vmem:[%s2 + $0x10] sm:$0xff] %vm254, %v227
  %258 = vst.msk [vmem:[%s2 + $0x18] sm:$0xff] %vm254, %v229
  %259 = vst.msk [vmem:[%s2 + $0x20] sm:$0xff] %vm254, %v231
  %260 = vst.msk [vmem:[%s2 + $0x28] sm:$0xff] %vm254, %v233
  %261 = vst.msk [vmem:[%s2 + $0x30] sm:$0xff] %vm254, %v235
  %262 = vst.msk [vmem:[%s2 + $0x38] sm:$0xff] %vm254, %v237
  %263 = vst.msk [vmem:[%s2 + $0x40] sm:$0xff] %vm254, %v239
  %264 = vst.msk [vmem:[%s2 + $0x48] sm:$0xff] %vm254, %v241
  %265 = vst.msk [vmem:[%s2 + $0x50] sm:$0xff] %vm254, %v243
  %266 = vst.msk [vmem:[%s2 + $0x58] sm:$0xff] %vm254, %v245
  %267 = vst.msk [vmem:[%s2 + $0x60] sm:$0xff] %vm254, %v247
  %268 = vst.msk [vmem:[%s2 + $0x68] sm:$0xff] %vm254, %v249
  %269 = vst.msk [vmem:[%s2 + $0x70] sm:$0xff] %vm254, %v251
  %270 = vst.msk [vmem:[%s2 + $0x78] sm:$0xff] %vm254, %v253
  // Predicated region
  $region10: #{tpu_custom_call.1} parent=0 // pred_check
    _
  $region11: #{tpu_custom_call.1} parent=0 // pred_check_branch
    %272 = sbr.rel (0) target = $region13
  $region12: #{tpu_custom_call.1} parent=0 // pred_region
    _
  $region13: #{tpu_custom_call.1} parent=0 // pred_fallthru
    _
  // Predicated region
  $region14: #{tpu_custom_call.1} parent=0 // pred_check
    _
  $region15: #{tpu_custom_call.1} parent=0 // pred_check_branch
    %274 = sbr.rel (0) target = $region17
  $region16: #{tpu_custom_call.1} parent=0 // pred_region
    _
  $region17: #{tpu_custom_call.1} parent=0 // pred_fallthru
    _

</llo_original>
